<compile_context>
chip_gen: v5e
topology: v5e:2x2
jax: 0.10.0
libtpu: 0.0.40
codegen_flags: <defaults>
</compile_context>

<pallas_src>
import jax
import jax.numpy as jnp
from jax.experimental import pallas as pl
from jax.experimental.pallas import tpu as pltpu

LANE = 128


def head_kernel(feat_ref, w_ref, b_ref, out_ref):
    """Fused global-average-pool + linear head.

    feat_ref: [TB, HW, C]  bf16  VMEM  (batch tile of the feature map)
    w_ref:    [C, T_pad]   bf16  VMEM  (resident: Linear weight, transposed+padded)
    b_ref:    [1, T_pad]   f32   VMEM  (resident)
    out_ref:  [TB, T_pad]  f32   VMEM
    """
    hw = feat_ref.shape[1]
    # Global average pool over the spatial axis (sublane reduce, f32 accumulate).
    pooled = jnp.sum(feat_ref[...].astype(jnp.float32), axis=1) * (1.0 / hw)
    # Linear head on the MXU: bf16 inputs, f32 accumulation.
    out = jnp.dot(pooled.astype(w_ref.dtype), w_ref[...],
                  preferred_element_type=jnp.float32)
    out_ref[...] = out + b_ref[...]


def base_model_head(feat_nchw, weight, bias):
    """feat_nchw: [B, C, H, W]; weight: [T, C] (torch Linear layout); bias: [T]."""
    B, C, H, W = feat_nchw.shape
    T = weight.shape[0]
    HW = H * W
    T_pad = ((T + LANE - 1) // LANE) * LANE

    # Layout plumbing: NCHW -> [B, HW, C] so channels are lane-dense in-kernel.
    # Cast to bf16 first so the transpose moves half the bytes.
    feat = feat_nchw.astype(jnp.bfloat16).reshape(B, C, HW).transpose(0, 2, 1)

    # Un-inflated Linear params: [C, T_pad] bf16 weight, [1, T_pad] f32 bias.
    w_pad = jnp.pad(weight.T, ((0, 0), (0, T_pad - T))).astype(jnp.bfloat16)
    b_pad = jnp.pad(bias.astype(jnp.float32), (0, T_pad - T)).reshape(1, T_pad)

    # Batch tile: 8-aligned (lane/sublane-friendly output block) and >= 2 grid
    # steps when B > 8 so both v7x TensorCores get work; capped at 64 rows
    # (bf16 feat tile <= ~2.5 MiB at 4x4, ~7.7 MiB at 7x7 -> double-buffered
    # comfortably inside every generation's VMEM budget).
    if B <= 8:
        tb = B
    else:
        tb = min(64, ((pl.cdiv(B, 2) + 7) // 8) * 8)
    grid = (pl.cdiv(B, tb),)

    out = pl.pallas_call(
        head_kernel,
        out_shape=jax.ShapeDtypeStruct((B, T_pad), jnp.float32),
        grid=grid,
        in_specs=[
            pl.BlockSpec((tb, HW, C), lambda i: (i, 0, 0)),   # feat: tiled over batch
            pl.BlockSpec((C, T_pad), lambda i: (0, 0)),       # weight: resident
            pl.BlockSpec((1, T_pad), lambda i: (0, 0)),       # bias: resident
        ],
        out_specs=pl.BlockSpec((tb, T_pad), lambda i: (i, 0)),
        compiler_params=pltpu.CompilerParams(
            dimension_semantics=("parallel",),
        ),
    )(feat, w_pad, b_pad)

    return out[:, :T]


def reference_head(feat_nchw, weight, bias):
    """Pure-JAX f32 reference mirroring the PyTorch forward (post-backbone)."""
    B, C, H, W = feat_nchw.shape
    pooled = jnp.mean(feat_nchw.astype(jnp.float32), axis=(2, 3))  # avg_pool2d over HxW
    pooled = pooled.reshape(-1, C)
    return pooled @ weight.T.astype(jnp.float32) + bias.astype(jnp.float32)


if __name__ == "__main__":
    # Shapes consistent with the module: efficientnet-b0 feature dim C=1280,
    # small 4x4 spatial map, batch 2, num_targets 4.
    B, C, H, W = 2, 1280, 4, 4
    NUM_TARGETS = 4

    key = jax.random.PRNGKey(0)
    k_feat, k_w, k_b = jax.random.split(key, 3)

    feat = jax.random.normal(k_feat, (B, C, H, W), dtype=jnp.float32)
    # Deterministic Linear(C, NUM_TARGETS) params (torch layout: weight [T, C]).
    weight = jax.random.normal(k_w, (NUM_TARGETS, C), dtype=jnp.float32) * (1.0 / C) ** 0.5
    bias = jax.random.normal(k_b, (NUM_TARGETS,), dtype=jnp.float32) * 0.01

    out = jax.block_until_ready(base_model_head(feat, weight, bias))
    ref = jax.block_until_ready(reference_head(feat, weight, bias))

    assert out.shape == (B, NUM_TARGETS), out.shape
    # bf16 inputs / f32 accumulation over a C=1280 contraction: loosen tolerance
    # vs the pure-f32 reference accordingly.
    assert jnp.allclose(out, ref, atol=2e-2, rtol=2e-2), (out, ref)
    print("KERNEL_OK")
</pallas_src>

<mosaic_0001>
module attributes {stable_mosaic.version = 11 : i64} {
  func.func @head_kernel(%arg0: i32, %arg1: memref<2x16x1280xbf16, #tpu.memory_space<vmem>>, %arg2: memref<1280x128xbf16, #tpu.memory_space<vmem>>, %arg3: memref<1x128xf32, #tpu.memory_space<vmem>>, %arg4: memref<2x128xf32, #tpu.memory_space<vmem>>) attributes {dimension_semantics = [#tpu.dimension_semantics<parallel>], iteration_bounds = array<i64: 1>, scalar_prefetch = 0 : i64, scratch_operands = 0 : i64, tpu.core_type = #tpu.core_type<tc>, window_params = [{transform_indices = @transform_0, window_bounds = array<i64: 2, 16, 1280>}, {pipeline_mode = #tpu.pipeline_mode<synchronous>, transform_indices = @transform_1, window_bounds = array<i64: 1280, 128>}, {pipeline_mode = #tpu.pipeline_mode<synchronous>, transform_indices = @transform_2, window_bounds = array<i64: 1, 128>}, {transform_indices = @transform_3, window_bounds = array<i64: 2, 128>}]} {
    %c0 = arith.constant 0 : index
    %c0_0 = arith.constant 0 : index
    %c0_1 = arith.constant 0 : index
    %0 = vector.load %arg1[%c0, %c0_0, %c0_1] : memref<2x16x1280xbf16, #tpu.memory_space<vmem>>, vector<2x16x1280xbf16>
    %1 = arith.extf %0 : vector<2x16x1280xbf16> to vector<2x16x1280xf32>
    %cst = arith.constant dense<0.000000e+00> : vector<2x1280xf32>
    %2 = vector.multi_reduction <add>, %1, %cst [1] : vector<2x16x1280xf32> to vector<2x1280xf32>
    %cst_2 = arith.constant 6.250000e-02 : f32
    %3 = vector.broadcast %cst_2 : f32 to vector<2x1280xf32>
    %4 = arith.mulf %2, %3 : vector<2x1280xf32>
    %5 = arith.truncf %4 : vector<2x1280xf32> to vector<2x1280xbf16>
    %c0_3 = arith.constant 0 : index
    %c0_4 = arith.constant 0 : index
    %6 = vector.load %arg2[%c0_3, %c0_4] : memref<1280x128xbf16, #tpu.memory_space<vmem>>, vector<1280x128xbf16>
    %cst_5 = arith.constant dense<0.000000e+00> : vector<2x128xf32>
    %7 = tpu.matmul %5, %6, %cst_5 {dimension_numbers = #tpu.dot_dimension_numbers<[1], [0], [0], [1], [0, 0, 1, 1], [], []>} : vector<2x1280xbf16>, vector<1280x128xbf16>, vector<2x128xf32> -> vector<2x128xf32>
    %c0_6 = arith.constant 0 : index
    %c0_7 = arith.constant 0 : index
    %8 = vector.load %arg3[%c0_6, %c0_7] : memref<1x128xf32, #tpu.memory_space<vmem>>, vector<1x128xf32>
    %9 = vector.broadcast %8 : vector<1x128xf32> to vector<2x128xf32>
    %10 = arith.addf %7, %9 : vector<2x128xf32>
    %c0_8 = arith.constant 0 : index
    %c0_9 = arith.constant 0 : index
    %11 = vector.load %arg4[%c0_8, %c0_9] : memref<2x128xf32, #tpu.memory_space<vmem>>, vector<2x128xf32>
    tpu.vector_store %arg4[%c0_8, %c0_9], %10 {strides = array<i32>} : memref<2x128xf32, #tpu.memory_space<vmem>>, vector<2x128xf32>,
    return
  }
  func.func @transform_0(%arg0: i32) -> (i32, i32, i32) {
    %c0_i32 = arith.constant 0 : i32
    %c0_i32_0 = arith.constant 0 : i32
    %c0_i32_1 = arith.constant 0 : i32
    return %arg0, %c0_i32, %c0_i32_0 : i32, i32, i32
  }
  func.func @transform_1(%arg0: i32) -> (i32, i32) {
    %c0_i32 = arith.constant 0 : i32
    %c0_i32_0 = arith.constant 0 : i32
    %c0_i32_1 = arith.constant 0 : i32
    return %c0_i32, %c0_i32_0 : i32, i32
  }
  func.func @transform_2(%arg0: i32) -> (i32, i32) {
    %c0_i32 = arith.constant 0 : i32
    %c0_i32_0 = arith.constant 0 : i32
    %c0_i32_1 = arith.constant 0 : i32
    return %c0_i32, %c0_i32_0 : i32, i32
  }
  func.func @transform_3(%arg0: i32) -> (i32, i32) {
    %c0_i32 = arith.constant 0 : i32
    %c0_i32_0 = arith.constant 0 : i32
    return %arg0, %c0_i32 : i32, i32
  }
}

</mosaic_0001>

<llo_original>
// kernel: tpu_custom_call.1
$region0: #{tpu_custom_call.1}
  #allocation0 [shape = 'u32[]', space=smem, size = 0x4, offset = 0x4, fixed_abs, tag = 'smem constant byte address 0x4 - core index']
  #allocation1 [shape = 'u32[72,128]{1,0:T(1,128)}', space=vmem, size = 0x9000, scoped, tag = 'internal scratch']
  %s0 = inlined_call_operand.hbm [shape: bf16[2,16,1280], index: 0, kind: input, shape index: {}]
  %s1 = inlined_call_operand.hbm [shape: bf16[1280,128], index: 1, kind: input, shape index: {}]
  %s2 = inlined_call_operand.vmem [shape: f32[1,128], index: 2, kind: input, shape index: {}]
  %s3 = inlined_call_operand.hbm [shape: f32[2,128], index: 3, kind: output, shape index: {}]
  %s4 = sld [smem:[#allocation0]]
  $region30: #{tpu_custom_call.1} parent=0
    _
  %s6 = ssub.s32 1, %s4
  %s7 = scalar_select 0, %s6, %s4
  $region1: #{tpu_custom_call.1} parent=0
    #allocation2 [shape = 'u8[81920]{0}', space=vmem, size = 0x14000, scoped, tag = 'input window, operand 0, single buffered']
    #allocation3 [shape = 's32[1]{0}', space=sflag, size = 0x4, scoped, tag = 'scoped memory for tpu_custom_call.1']
    #allocation4 [shape = 's32[1]{0}', space=sflag, size = 0x4, scoped, tag = 'scoped memory for tpu_custom_call.1']
    #allocation5 [shape = 'u8[327680]{0}', space=vmem, size = 0x50000, scoped, tag = 'input window, operand 1, single buffered']
    #allocation6 [shape = 's32[1]{0}', space=sflag, size = 0x4, scoped, tag = 'scoped memory for tpu_custom_call.1']
    #allocation7 [shape = 'u8[1024]{0}', space=vmem, size = 0x400, scoped, tag = 'output window, operand 0, single buffered']
    %8 = vsyncpa [#allocation3], 0
    %9 = vsyncpa [#allocation6], 0
    %10 = vsyncpa [#allocation4], 0
    // Predicated region
    $region2: #{tpu_custom_call.1} parent=1 // pred_check
      _
    $region3: #{tpu_custom_call.1} parent=1 // pred_check_branch
      %12 = sbr.rel (0) target = $region5
    $region4: #{tpu_custom_call.1} parent=1 // pred_region
      %14 = vsyncadd [#allocation3], 0
      %s15 = sshll.u32 %s0, 4
      %s16 = int_to_ptr.hbm [resolvable:$true] %s15
      %s17 = sshll.u32 [#allocation2], 4
      %s18 = int_to_ptr.vmem [resolvable:$true] %s17
      %23 = dma.hbm_to_vmem [thread:$0]  %s16, 2560, %s18, [#allocation3], 640, 640, 40
    $region5: #{tpu_custom_call.1} parent=1 // pred_fallthru
      _
    // Predicated region
    $region6: #{tpu_custom_call.1} parent=1 // pred_check
      _
    $region7: #{tpu_custom_call.1} parent=1 // pred_check_branch
      %25 = sbr.rel (0) target = $region9
    $region8: #{tpu_custom_call.1} parent=1 // pred_region
      %27 = vsyncadd [#allocation6], 0
      %s28 = sshll.u32 %s1, 4
      %s29 = int_to_ptr.hbm [resolvable:$true] %s28
      %s30 = sshll.u32 [#allocation5], 4
      %s31 = int_to_ptr.vmem [resolvable:$true] %s30
      %36 = dma.hbm_to_vmem [thread:$0]  %s29, 10240, %s31, [#allocation6], 64, 64, 4
    $region9: #{tpu_custom_call.1} parent=1 // pred_fallthru
      _
    // Predicated region
    $region10: #{tpu_custom_call.1} parent=1 // pred_check
      _
    $region11: #{tpu_custom_call.1} parent=1 // pred_check_branch
      %38 = sbr.rel (0) target = $region13
    $region12: #{tpu_custom_call.1} parent=1 // pred_region
      _
    $region13: #{tpu_custom_call.1} parent=1 // pred_fallthru
      _
    // Predicated region
    $region14: #{tpu_custom_call.1} parent=1 // pred_check
      _
    $region15: #{tpu_custom_call.1} parent=1 // pred_check_branch
      %40 = sbr.rel (0) target = $region17
    $region16: #{tpu_custom_call.1} parent=1 // pred_region
      %42 = dma.done [#allocation3], 2560
    $region17: #{tpu_custom_call.1} parent=1 // pred_fallthru
      _
    // Predicated region
    $region18: #{tpu_custom_call.1} parent=1 // pred_check
      _
    $region19: #{tpu_custom_call.1} parent=1 // pred_check_branch
      %44 = sbr.rel (0) target = $region21
    $region20: #{tpu_custom_call.1} parent=1 // pred_region
      %46 = dma.done [#allocation6], 10240
    $region21: #{tpu_custom_call.1} parent=1 // pred_fallthru
      _
    %v47 = vld [vmem:[#allocation2] sm:$0xff]
    %v48 = vld [vmem:[#allocation2 + $0x8] sm:$0xff]
    %v49 = vld [vmem:[#allocation2 + $0x10] sm:$0xff]
    %v50 = vld [vmem:[#allocation2 + $0x18] sm:$0xff]
    %v51 = vld [vmem:[#allocation2 + $0x20] sm:$0xff]
    %v52 = vld [vmem:[#allocation2 + $0x28] sm:$0xff]
    %v53 = vld [vmem:[#allocation2 + $0x30] sm:$0xff]
    %v54 = vld [vmem:[#allocation2 + $0x38] sm:$0xff]
    %v55 = vld [vmem:[#allocation2 + $0x40] sm:$0xff]
    %v56 = vld [vmem:[#allocation2 + $0x48] sm:$0xff]
    %v57 = vld [vmem:[#allocation2 + $0x50] sm:$0xff]
    %v58 = vld [vmem:[#allocation2 + $0x58] sm:$0xff]
    %v59 = vld [vmem:[#allocation2 + $0x60] sm:$0xff]
    %v60 = vld [vmem:[#allocation2 + $0x68] sm:$0xff]
    %v61 = vld [vmem:[#allocation2 + $0x70] sm:$0xff]
    %v62 = vld [vmem:[#allocation2 + $0x78] sm:$0xff]
    %v63 = vld [vmem:[#allocation2 + $0x80] sm:$0xff]
    %v64 = vld [vmem:[#allocation2 + $0x88] sm:$0xff]
    %v65 = vld [vmem:[#allocation2 + $0x90] sm:$0xff]
    %v66 = vld [vmem:[#allocation2 + $0x98] sm:$0xff]
    %v67 = vunpack.c.l.bf16 %v47
    %v68 = vunpack.c.h.bf16 %v47
    %v69 = vunpack.c.l.bf16 %v48
    %v70 = vunpack.c.h.bf16 %v48
    %v71 = vunpack.c.l.bf16 %v49
    %v72 = vunpack.c.h.bf16 %v49
    %v73 = vunpack.c.l.bf16 %v50
    %v74 = vunpack.c.h.bf16 %v50
    %v75 = vunpack.c.l.bf16 %v51
    %v76 = vunpack.c.h.bf16 %v51
    %v77 = vunpack.c.l.bf16 %v52
    %v78 = vunpack.c.h.bf16 %v52
    %v79 = vunpack.c.l.bf16 %v53
    %v80 = vunpack.c.h.bf16 %v53
    %v81 = vunpack.c.l.bf16 %v54
    %v82 = vunpack.c.h.bf16 %v54
    %v83 = vunpack.c.l.bf16 %v55
    %v84 = vunpack.c.h.bf16 %v55
    %v85 = vunpack.c.l.bf16 %v56
    %v86 = vunpack.c.h.bf16 %v56
    %v87 = vunpack.c.l.bf16 %v57
    %v88 = vunpack.c.h.bf16 %v57
    %v89 = vunpack.c.l.bf16 %v58
    %v90 = vunpack.c.h.bf16 %v58
    %v91 = vunpack.c.l.bf16 %v59
    %v92 = vunpack.c.h.bf16 %v59
    %v93 = vunpack.c.l.bf16 %v60
    %v94 = vunpack.c.h.bf16 %v60
    %v95 = vunpack.c.l.bf16 %v61
    %v96 = vunpack.c.h.bf16 %v61
    %v97 = vunpack.c.l.bf16 %v62
    %v98 = vunpack.c.h.bf16 %v62
    %v99 = vunpack.c.l.bf16 %v63
    %v100 = vunpack.c.h.bf16 %v63
    %v101 = vunpack.c.l.bf16 %v64
    %v102 = vunpack.c.h.bf16 %v64
    %v103 = vunpack.c.l.bf16 %v65
    %v104 = vunpack.c.h.bf16 %v65
    %v105 = vunpack.c.l.bf16 %v66
    %v106 = vunpack.c.h.bf16 %v66
    %v107 = vadd.f32 %v67, %v77
    %v108 = vrot.slane %v107, 4
    %v109 = vadd.f32 %v107, %v108
    %v110 = vrot.slane %v109, 2
    %v111 = vadd.f32 %v109, %v110
    %v112 = vrot.slane %v111, 1
    %v113 = vadd.f32 %v111, %v112
    %v114 = vadd.f32 %v68, %v78
    %v115 = vrot.slane %v114, 4
    %v116 = vadd.f32 %v114, %v115
    %v117 = vrot.slane %v116, 2
    %v118 = vadd.f32 %v116, %v117
    %v119 = vrot.slane %v118, 1
    %v120 = vadd.f32 %v118, %v119
    %v121 = vadd.f32 %v69, %v79
    %v122 = vrot.slane %v121, 4
    %v123 = vadd.f32 %v121, %v122
    %v124 = vrot.slane %v123, 2
    %v125 = vadd.f32 %v123, %v124
    %v126 = vrot.slane %v125, 1
    %v127 = vadd.f32 %v125, %v126
    %v128 = vadd.f32 %v70, %v80
    %v129 = vrot.slane %v128, 4
    %v130 = vadd.f32 %v128, %v129
    %v131 = vrot.slane %v130, 2
    %v132 = vadd.f32 %v130, %v131
    %v133 = vrot.slane %v132, 1
    %v134 = vadd.f32 %v132, %v133
    %v135 = vadd.f32 %v71, %v81
    %v136 = vrot.slane %v135, 4
    %v137 = vadd.f32 %v135, %v136
    %v138 = vrot.slane %v137, 2
    %v139 = vadd.f32 %v137, %v138
    %v140 = vrot.slane %v139, 1
    %v141 = vadd.f32 %v139, %v140
    %v142 = vadd.f32 %v72, %v82
    %v143 = vrot.slane %v142, 4
    %v144 = vadd.f32 %v142, %v143
    %v145 = vrot.slane %v144, 2
    %v146 = vadd.f32 %v144, %v145
    %v147 = vrot.slane %v146, 1
    %v148 = vadd.f32 %v146, %v147
    %v149 = vadd.f32 %v73, %v83
    %v150 = vrot.slane %v149, 4
    %v151 = vadd.f32 %v149, %v150
    %v152 = vrot.slane %v151, 2
    %v153 = vadd.f32 %v151, %v152
    %v154 = vrot.slane %v153, 1
    %v155 = vadd.f32 %v153, %v154
    %v156 = vadd.f32 %v74, %v84
    %v157 = vrot.slane %v156, 4
    %v158 = vadd.f32 %v156, %v157
    %v159 = vrot.slane %v158, 2
    %v160 = vadd.f32 %v158, %v159
    %v161 = vrot.slane %v160, 1
    %v162 = vadd.f32 %v160, %v161
    %v163 = vadd.f32 %v75, %v85
    %v164 = vrot.slane %v163, 4
    %v165 = vadd.f32 %v163, %v164
    %v166 = vrot.slane %v165, 2
    %v167 = vadd.f32 %v165, %v166
    %v168 = vrot.slane %v167, 1
    %v169 = vadd.f32 %v167, %v168
    %v170 = vadd.f32 %v76, %v86
    %v171 = vrot.slane %v170, 4
    %v172 = vadd.f32 %v170, %v171
    %v173 = vrot.slane %v172, 2
    %v174 = vadd.f32 %v172, %v173
    %v175 = vrot.slane %v174, 1
    %v176 = vadd.f32 %v174, %v175
    %v177 = vadd.f32 %v87, %v97
    %v178 = vrot.slane %v177, 4
    %v179 = vadd.f32 %v177, %v178
    %v180 = vrot.slane %v179, 2
    %v181 = vadd.f32 %v179, %v180
    %v182 = vrot.slane %v181, 1
    %v183 = vadd.f32 %v181, %v182
    %v184 = vadd.f32 %v88, %v98
    %v185 = vrot.slane %v184, 4
    %v186 = vadd.f32 %v184, %v185
    %v187 = vrot.slane %v186, 2
    %v188 = vadd.f32 %v186, %v187
    %v189 = vrot.slane %v188, 1
    %v190 = vadd.f32 %v188, %v189
    %v191 = vadd.f32 %v89, %v99
    %v192 = vrot.slane %v191, 4
    %v193 = vadd.f32 %v191, %v192
    %v194 = vrot.slane %v193, 2
    %v195 = vadd.f32 %v193, %v194
    %v196 = vrot.slane %v195, 1
    %v197 = vadd.f32 %v195, %v196
    %v198 = vadd.f32 %v90, %v100
    %v199 = vrot.slane %v198, 4
    %v200 = vadd.f32 %v198, %v199
    %v201 = vrot.slane %v200, 2
    %v202 = vadd.f32 %v200, %v201
    %v203 = vrot.slane %v202, 1
    %v204 = vadd.f32 %v202, %v203
    %v205 = vadd.f32 %v91, %v101
    %v206 = vrot.slane %v205, 4
    %v207 = vadd.f32 %v205, %v206
    %v208 = vrot.slane %v207, 2
    %v209 = vadd.f32 %v207, %v208
    %v210 = vrot.slane %v209, 1
    %v211 = vadd.f32 %v209, %v210
    %v212 = vadd.f32 %v92, %v102
    %v213 = vrot.slane %v212, 4
    %v214 = vadd.f32 %v212, %v213
    %v215 = vrot.slane %v214, 2
    %v216 = vadd.f32 %v214, %v215
    %v217 = vrot.slane %v216, 1
    %v218 = vadd.f32 %v216, %v217
    %v219 = vadd.f32 %v93, %v103
    %v220 = vrot.slane %v219, 4
    %v221 = vadd.f32 %v219, %v220
    %v222 = vrot.slane %v221, 2
    %v223 = vadd.f32 %v221, %v222
    %v224 = vrot.slane %v223, 1
    %v225 = vadd.f32 %v223, %v224
    %v226 = vadd.f32 %v94, %v104
    %v227 = vrot.slane %v226, 4
    %v228 = vadd.f32 %v226, %v227
    %v229 = vrot.slane %v228, 2
    %v230 = vadd.f32 %v228, %v229
    %v231 = vrot.slane %v230, 1
    %v232 = vadd.f32 %v230, %v231
    %v233 = vadd.f32 %v95, %v105
    %v234 = vrot.slane %v233, 4
    %v235 = vadd.f32 %v233, %v234
    %v236 = vrot.slane %v235, 2
    %v237 = vadd.f32 %v235, %v236
    %v238 = vrot.slane %v237, 1
    %v239 = vadd.f32 %v237, %v238
    %v240 = vadd.f32 %v96, %v106
    %v241 = vrot.slane %v240, 4
    %v242 = vadd.f32 %v240, %v241
    %v243 = vrot.slane %v242, 2
    %v244 = vadd.f32 %v242, %v243
    %v245 = vrot.slane %v244, 1
    %v246 = vadd.f32 %v244, %v245
    %v247 = vmul.f32 %v113, 0.0625
    %v248 = vmul.f32 %v120, 0.0625
    %v249 = vmul.f32 %v127, 0.0625
    %v250 = vmul.f32 %v134, 0.0625
    %v251 = vmul.f32 %v141, 0.0625
    %v252 = vmul.f32 %v148, 0.0625
    %v253 = vmul.f32 %v155, 0.0625
    %v254 = vmul.f32 %v162, 0.0625
    %v255 = vmul.f32 %v169, 0.0625
    %v256 = vmul.f32 %v176, 0.0625
    %v257 = vmul.f32 %v183, 0.0625
    %v258 = vmul.f32 %v190, 0.0625
    %v259 = vmul.f32 %v197, 0.0625
    %v260 = vmul.f32 %v204, 0.0625
    %v261 = vmul.f32 %v211, 0.0625
    %v262 = vmul.f32 %v218, 0.0625
    %v263 = vmul.f32 %v225, 0.0625
    %v264 = vmul.f32 %v232, 0.0625
    %v265 = vmul.f32 %v239, 0.0625
    %v266 = vmul.f32 %v246, 0.0625
    %v267 = vpack.c.bf16 %v247, %v247
    %v268 = vpack.c.bf16 %v248, %v248
    %v269 = vpack.c.bf16 %v249, %v249
    %v270 = vpack.c.bf16 %v250, %v250
    %v271 = vpack.c.bf16 %v251, %v251
    %v272 = vpack.c.bf16 %v252, %v252
    %v273 = vpack.c.bf16 %v253, %v253
    %v274 = vpack.c.bf16 %v254, %v254
    %v275 = vpack.c.bf16 %v255, %v255
    %v276 = vpack.c.bf16 %v256, %v256
    %v277 = vpack.c.bf16 %v257, %v257
    %v278 = vpack.c.bf16 %v258, %v258
    %v279 = vpack.c.bf16 %v259, %v259
    %v280 = vpack.c.bf16 %v260, %v260
    %v281 = vpack.c.bf16 %v261, %v261
    %v282 = vpack.c.bf16 %v262, %v262
    %v283 = vpack.c.bf16 %v263, %v263
    %v284 = vpack.c.bf16 %v264, %v264
    %v285 = vpack.c.bf16 %v265, %v265
    %v286 = vpack.c.bf16 %v266, %v266
    %v287 = vld [vmem:[#allocation5] sm:$0xf]
    %v288 = vld [vmem:[#allocation5 + $0x4] sm:$0xf]
    %v289 = vld [vmem:[#allocation5 + $0x8] sm:$0xf]
    %v290 = vld [vmem:[#allocation5 + $0xc] sm:$0xf]
    %v291 = vld [vmem:[#allocation5 + $0x10] sm:$0xf]
    %v292 = vld [vmem:[#allocation5 + $0x14] sm:$0xf]
    %v293 = vld [vmem:[#allocation5 + $0x18] sm:$0xf]
    %v294 = vld [vmem:[#allocation5 + $0x1c] sm:$0xf]
    %v295 = vld [vmem:[#allocation5 + $0x20] sm:$0xf]
    %v296 = vld [vmem:[#allocation5 + $0x24] sm:$0xf]
    %v297 = vld [vmem:[#allocation5 + $0x28] sm:$0xf]
    %v298 = vld [vmem:[#allocation5 + $0x2c] sm:$0xf]
    %v299 = vld [vmem:[#allocation5 + $0x30] sm:$0xf]
    %v300 = vld [vmem:[#allocation5 + $0x34] sm:$0xf]
    %v301 = vld [vmem:[#allocation5 + $0x38] sm:$0xf]
    %v302 = vld [vmem:[#allocation5 + $0x3c] sm:$0xf]
    %v303 = vld [vmem:[#allocation5 + $0x40] sm:$0xf]
    %v304 = vld [vmem:[#allocation5 + $0x44] sm:$0xf]
    %v305 = vld [vmem:[#allocation5 + $0x48] sm:$0xf]
    %v306 = vld [vmem:[#allocation5 + $0x4c] sm:$0xf]
    %v307 = vld [vmem:[#allocation5 + $0x50] sm:$0xf]
    %v308 = vld [vmem:[#allocation5 + $0x54] sm:$0xf]
    %v309 = vld [vmem:[#allocation5 + $0x58] sm:$0xf]
    %v310 = vld [vmem:[#allocation5 + $0x5c] sm:$0xf]
    %v311 = vld [vmem:[#allocation5 + $0x60] sm:$0xf]
    %v312 = vld [vmem:[#allocation5 + $0x64] sm:$0xf]
    %v313 = vld [vmem:[#allocation5 + $0x68] sm:$0xf]
    %v314 = vld [vmem:[#allocation5 + $0x6c] sm:$0xf]
    %v315 = vld [vmem:[#allocation5 + $0x70] sm:$0xf]
    %v316 = vld [vmem:[#allocation5 + $0x74] sm:$0xf]
    %v317 = vld [vmem:[#allocation5 + $0x78] sm:$0xf]
    %v318 = vld [vmem:[#allocation5 + $0x7c] sm:$0xf]
    %v319 = vld [vmem:[#allocation5 + $0x80] sm:$0xf]
    %v320 = vld [vmem:[#allocation5 + $0x84] sm:$0xf]
    %v321 = vld [vmem:[#allocation5 + $0x88] sm:$0xf]
    %v322 = vld [vmem:[#allocation5 + $0x8c] sm:$0xf]
    %v323 = vld [vmem:[#allocation5 + $0x90] sm:$0xf]
    %v324 = vld [vmem:[#allocation5 + $0x94] sm:$0xf]
    %v325 = vld [vmem:[#allocation5 + $0x98] sm:$0xf]
    %v326 = vld [vmem:[#allocation5 + $0x9c] sm:$0xf]
    %v327 = vld [vmem:[#allocation5 + $0xa0] sm:$0xf]
    %v328 = vld [vmem:[#allocation5 + $0xa4] sm:$0xf]
    %v329 = vld [vmem:[#allocation5 + $0xa8] sm:$0xf]
    %v330 = vld [vmem:[#allocation5 + $0xac] sm:$0xf]
    %v331 = vld [vmem:[#allocation5 + $0xb0] sm:$0xf]
    %v332 = vld [vmem:[#allocation5 + $0xb4] sm:$0xf]
    %v333 = vld [vmem:[#allocation5 + $0xb8] sm:$0xf]
    %v334 = vld [vmem:[#allocation5 + $0xbc] sm:$0xf]
    %v335 = vld [vmem:[#allocation5 + $0xc0] sm:$0xf]
    %v336 = vld [vmem:[#allocation5 + $0xc4] sm:$0xf]
    %v337 = vld [vmem:[#allocation5 + $0xc8] sm:$0xf]
    %v338 = vld [vmem:[#allocation5 + $0xcc] sm:$0xf]
    %v339 = vld [vmem:[#allocation5 + $0xd0] sm:$0xf]
    %v340 = vld [vmem:[#allocation5 + $0xd4] sm:$0xf]
    %v341 = vld [vmem:[#allocation5 + $0xd8] sm:$0xf]
    %v342 = vld [vmem:[#allocation5 + $0xdc] sm:$0xf]
    %v343 = vld [vmem:[#allocation5 + $0xe0] sm:$0xf]
    %v344 = vld [vmem:[#allocation5 + $0xe4] sm:$0xf]
    %v345 = vld [vmem:[#allocation5 + $0xe8] sm:$0xf]
    %v346 = vld [vmem:[#allocation5 + $0xec] sm:$0xf]
    %v347 = vld [vmem:[#allocation5 + $0xf0] sm:$0xf]
    %v348 = vld [vmem:[#allocation5 + $0xf4] sm:$0xf]
    %v349 = vld [vmem:[#allocation5 + $0xf8] sm:$0xf]
    %v350 = vld [vmem:[#allocation5 + $0xfc] sm:$0xf]
    %v351 = vld [vmem:[#allocation5 + $0x100] sm:$0xf]
    %v352 = vld [vmem:[#allocation5 + $0x104] sm:$0xf]
    %v353 = vld [vmem:[#allocation5 + $0x108] sm:$0xf]
    %v354 = vld [vmem:[#allocation5 + $0x10c] sm:$0xf]
    %v355 = vld [vmem:[#allocation5 + $0x110] sm:$0xf]
    %v356 = vld [vmem:[#allocation5 + $0x114] sm:$0xf]
    %v357 = vld [vmem:[#allocation5 + $0x118] sm:$0xf]
    %v358 = vld [vmem:[#allocation5 + $0x11c] sm:$0xf]
    %v359 = vld [vmem:[#allocation5 + $0x120] sm:$0xf]
    %v360 = vld [vmem:[#allocation5 + $0x124] sm:$0xf]
    %v361 = vld [vmem:[#allocation5 + $0x128] sm:$0xf]
    %v362 = vld [vmem:[#allocation5 + $0x12c] sm:$0xf]
    %v363 = vld [vmem:[#allocation5 + $0x130] sm:$0xf]
    %v364 = vld [vmem:[#allocation5 + $0x134] sm:$0xf]
    %v365 = vld [vmem:[#allocation5 + $0x138] sm:$0xf]
    %v366 = vld [vmem:[#allocation5 + $0x13c] sm:$0xf]
    %v367 = vld [vmem:[#allocation5 + $0x140] sm:$0xf]
    %v368 = vld [vmem:[#allocation5 + $0x144] sm:$0xf]
    %v369 = vld [vmem:[#allocation5 + $0x148] sm:$0xf]
    %v370 = vld [vmem:[#allocation5 + $0x14c] sm:$0xf]
    %v371 = vld [vmem:[#allocation5 + $0x150] sm:$0xf]
    %v372 = vld [vmem:[#allocation5 + $0x154] sm:$0xf]
    %v373 = vld [vmem:[#allocation5 + $0x158] sm:$0xf]
    %v374 = vld [vmem:[#allocation5 + $0x15c] sm:$0xf]
    %v375 = vld [vmem:[#allocation5 + $0x160] sm:$0xf]
    %v376 = vld [vmem:[#allocation5 + $0x164] sm:$0xf]
    %v377 = vld [vmem:[#allocation5 + $0x168] sm:$0xf]
    %v378 = vld [vmem:[#allocation5 + $0x16c] sm:$0xf]
    %v379 = vld [vmem:[#allocation5 + $0x170] sm:$0xf]
    %v380 = vld [vmem:[#allocation5 + $0x174] sm:$0xf]
    %v381 = vld [vmem:[#allocation5 + $0x178] sm:$0xf]
    %v382 = vld [vmem:[#allocation5 + $0x17c] sm:$0xf]
    %v383 = vld [vmem:[#allocation5 + $0x180] sm:$0xf]
    %v384 = vld [vmem:[#allocation5 + $0x184] sm:$0xf]
    %v385 = vld [vmem:[#allocation5 + $0x188] sm:$0xf]
    %v386 = vld [vmem:[#allocation5 + $0x18c] sm:$0xf]
    %v387 = vld [vmem:[#allocation5 + $0x190] sm:$0xf]
    %v388 = vld [vmem:[#allocation5 + $0x194] sm:$0xf]
    %v389 = vld [vmem:[#allocation5 + $0x198] sm:$0xf]
    %v390 = vld [vmem:[#allocation5 + $0x19c] sm:$0xf]
    %v391 = vld [vmem:[#allocation5 + $0x1a0] sm:$0xf]
    %v392 = vld [vmem:[#allocation5 + $0x1a4] sm:$0xf]
    %v393 = vld [vmem:[#allocation5 + $0x1a8] sm:$0xf]
    %v394 = vld [vmem:[#allocation5 + $0x1ac] sm:$0xf]
    %v395 = vld [vmem:[#allocation5 + $0x1b0] sm:$0xf]
    %v396 = vld [vmem:[#allocation5 + $0x1b4] sm:$0xf]
    %v397 = vld [vmem:[#allocation5 + $0x1b8] sm:$0xf]
    %v398 = vld [vmem:[#allocation5 + $0x1bc] sm:$0xf]
    %v399 = vld [vmem:[#allocation5 + $0x1c0] sm:$0xf]
    %v400 = vld [vmem:[#allocation5 + $0x1c4] sm:$0xf]
    %v401 = vld [vmem:[#allocation5 + $0x1c8] sm:$0xf]
    %v402 = vld [vmem:[#allocation5 + $0x1cc] sm:$0xf]
    %v403 = vld [vmem:[#allocation5 + $0x1d0] sm:$0xf]
    %v404 = vld [vmem:[#allocation5 + $0x1d4] sm:$0xf]
    %v405 = vld [vmem:[#allocation5 + $0x1d8] sm:$0xf]
    %v406 = vld [vmem:[#allocation5 + $0x1dc] sm:$0xf]
    %v407 = vld [vmem:[#allocation5 + $0x1e0] sm:$0xf]
    %v408 = vld [vmem:[#allocation5 + $0x1e4] sm:$0xf]
    %v409 = vld [vmem:[#allocation5 + $0x1e8] sm:$0xf]
    %v410 = vld [vmem:[#allocation5 + $0x1ec] sm:$0xf]
    %v411 = vld [vmem:[#allocation5 + $0x1f0] sm:$0xf]
    %v412 = vld [vmem:[#allocation5 + $0x1f4] sm:$0xf]
    %v413 = vld [vmem:[#allocation5 + $0x1f8] sm:$0xf]
    %v414 = vld [vmem:[#allocation5 + $0x1fc] sm:$0xf]
    %v415 = vld [vmem:[#allocation5 + $0x200] sm:$0xf]
    %v416 = vld [vmem:[#allocation5 + $0x204] sm:$0xf]
    %v417 = vld [vmem:[#allocation5 + $0x208] sm:$0xf]
    %v418 = vld [vmem:[#allocation5 + $0x20c] sm:$0xf]
    %v419 = vld [vmem:[#allocation5 + $0x210] sm:$0xf]
    %v420 = vld [vmem:[#allocation5 + $0x214] sm:$0xf]
    %v421 = vld [vmem:[#allocation5 + $0x218] sm:$0xf]
    %v422 = vld [vmem:[#allocation5 + $0x21c] sm:$0xf]
    %v423 = vld [vmem:[#allocation5 + $0x220] sm:$0xf]
    %v424 = vld [vmem:[#allocation5 + $0x224] sm:$0xf]
    %v425 = vld [vmem:[#allocation5 + $0x228] sm:$0xf]
    %v426 = vld [vmem:[#allocation5 + $0x22c] sm:$0xf]
    %v427 = vld [vmem:[#allocation5 + $0x230] sm:$0xf]
    %v428 = vld [vmem:[#allocation5 + $0x234] sm:$0xf]
    %v429 = vld [vmem:[#allocation5 + $0x238] sm:$0xf]
    %v430 = vld [vmem:[#allocation5 + $0x23c] sm:$0xf]
    %v431 = vld [vmem:[#allocation5 + $0x240] sm:$0xf]
    %v432 = vld [vmem:[#allocation5 + $0x244] sm:$0xf]
    %v433 = vld [vmem:[#allocation5 + $0x248] sm:$0xf]
    %v434 = vld [vmem:[#allocation5 + $0x24c] sm:$0xf]
    %v435 = vld [vmem:[#allocation5 + $0x250] sm:$0xf]
    %v436 = vld [vmem:[#allocation5 + $0x254] sm:$0xf]
    %v437 = vld [vmem:[#allocation5 + $0x258] sm:$0xf]
    %v438 = vld [vmem:[#allocation5 + $0x25c] sm:$0xf]
    %v439 = vld [vmem:[#allocation5 + $0x260] sm:$0xf]
    %v440 = vld [vmem:[#allocation5 + $0x264] sm:$0xf]
    %v441 = vld [vmem:[#allocation5 + $0x268] sm:$0xf]
    %v442 = vld [vmem:[#allocation5 + $0x26c] sm:$0xf]
    %v443 = vld [vmem:[#allocation5 + $0x270] sm:$0xf]
    %v444 = vld [vmem:[#allocation5 + $0x274] sm:$0xf]
    %v445 = vld [vmem:[#allocation5 + $0x278] sm:$0xf]
    %v446 = vld [vmem:[#allocation5 + $0x27c] sm:$0xf]
    %v447 = vld [vmem:[%s2] sm:$0x1]
    %v449 = vperm.slane %v447, 0
    %v471 = vunpack.c.l.b16 %v267
    %v472 = vunpack.c.l.b16 %v268
    %v473 = vunpack.c.l.b16 %v269
    %v474 = vunpack.c.l.b16 %v270
    %v475 = vunpack.c.l.b16 %v271
    %v476 = vunpack.c.l.b16 %v272
    %v477 = vunpack.c.l.b16 %v273
    %v478 = vunpack.c.l.b16 %v274
    %v479 = vunpack.c.l.b16 %v275
    %v480 = vunpack.c.l.b16 %v276
    %v481 = vunpack.c.l.b16 %v277
    %v482 = vunpack.c.l.b16 %v278
    %v483 = vunpack.c.l.b16 %v279
    %v484 = vunpack.c.l.b16 %v280
    %v485 = vunpack.c.l.b16 %v281
    %v486 = vunpack.c.l.b16 %v282
    %v487 = vunpack.c.l.b16 %v283
    %v488 = vunpack.c.l.b16 %v284
    %v489 = vunpack.c.l.b16 %v285
    %v490 = vunpack.c.l.b16 %v286
    %vm491 = vcmask 1041409
    %v492 = vsel %vm491, %v481, %v471
    %v493 = vsel %vm491, %v482, %v472
    %v494 = vsel %vm491, %v483, %v473
    %v495 = vsel %vm491, %v484, %v474
    %v496 = vsel %vm491, %v485, %v475
    %v497 = vsel %vm491, %v486, %v476
    %v498 = vsel %vm491, %v487, %v477
    %v499 = vsel %vm491, %v488, %v478
    %v500 = vsel %vm491, %v489, %v479
    %v501 = vsel %vm491, %v490, %v480
    %v502 = vpack.c.b16 %v492, %v492
    %v503 = vpack.c.b16 %v493, %v493
    %v504 = vpack.c.b16 %v494, %v494
    %v505 = vpack.c.b16 %v495, %v495
    %v506 = vpack.c.b16 %v496, %v496
    %v507 = vpack.c.b16 %v497, %v497
    %v508 = vpack.c.b16 %v498, %v498
    %v509 = vpack.c.b16 %v499, %v499
    %v510 = vpack.c.b16 %v500, %v500
    %v511 = vpack.c.b16 %v501, %v501
    %v682 = vunpack.c.l.b16 %v287
    %v683 = vunpack.c.l.b16 %v288
    %v684 = vunpack.c.l.b16 %v289
    %v685 = vunpack.c.l.b16 %v290
    %v686 = vunpack.c.l.b16 %v291
    %v687 = vunpack.c.l.b16 %v292
    %v688 = vunpack.c.l.b16 %v293
    %v689 = vunpack.c.l.b16 %v294
    %v690 = vunpack.c.l.b16 %v295
    %v691 = vunpack.c.l.b16 %v296
    %v692 = vunpack.c.l.b16 %v297
    %v693 = vunpack.c.l.b16 %v298
    %v694 = vunpack.c.l.b16 %v299
    %v695 = vunpack.c.l.b16 %v300
    %v696 = vunpack.c.l.b16 %v301
    %v697 = vunpack.c.l.b16 %v302
    %v698 = vunpack.c.l.b16 %v303
    %v699 = vunpack.c.l.b16 %v304
    %v700 = vunpack.c.l.b16 %v305
    %v701 = vunpack.c.l.b16 %v306
    %v702 = vunpack.c.l.b16 %v307
    %v703 = vunpack.c.l.b16 %v308
    %v704 = vunpack.c.l.b16 %v309
    %v705 = vunpack.c.l.b16 %v310
    %v706 = vunpack.c.l.b16 %v311
    %v707 = vunpack.c.l.b16 %v312
    %v708 = vunpack.c.l.b16 %v313
    %v709 = vunpack.c.l.b16 %v314
    %v710 = vunpack.c.l.b16 %v315
    %v711 = vunpack.c.l.b16 %v316
    %v712 = vunpack.c.l.b16 %v317
    %v713 = vunpack.c.l.b16 %v318
    %v714 = vunpack.c.l.b16 %v319
    %v715 = vunpack.c.l.b16 %v320
    %v716 = vunpack.c.l.b16 %v321
    %v717 = vunpack.c.l.b16 %v322
    %v718 = vunpack.c.l.b16 %v323
    %v719 = vunpack.c.l.b16 %v324
    %v720 = vunpack.c.l.b16 %v325
    %v721 = vunpack.c.l.b16 %v326
    %v722 = vunpack.c.l.b16 %v327
    %v723 = vunpack.c.l.b16 %v328
    %v724 = vunpack.c.l.b16 %v329
    %v725 = vunpack.c.l.b16 %v330
    %v726 = vunpack.c.l.b16 %v331
    %v727 = vunpack.c.l.b16 %v332
    %v728 = vunpack.c.l.b16 %v333
    %v729 = vunpack.c.l.b16 %v334
    %v730 = vunpack.c.l.b16 %v335
    %v731 = vunpack.c.l.b16 %v336
    %v732 = vunpack.c.l.b16 %v337
    %v733 = vunpack.c.l.b16 %v338
    %v734 = vunpack.c.l.b16 %v339
    %v735 = vunpack.c.l.b16 %v340
    %v736 = vunpack.c.l.b16 %v341
    %v737 = vunpack.c.l.b16 %v342
    %v738 = vunpack.c.l.b16 %v343
    %v739 = vunpack.c.l.b16 %v344
    %v740 = vunpack.c.l.b16 %v345
    %v741 = vunpack.c.l.b16 %v346
    %v742 = vunpack.c.l.b16 %v347
    %v743 = vunpack.c.l.b16 %v348
    %v744 = vunpack.c.l.b16 %v349
    %v745 = vunpack.c.l.b16 %v350
    %v746 = vunpack.c.l.b16 %v351
    %v747 = vunpack.c.l.b16 %v352
    %v748 = vunpack.c.l.b16 %v353
    %v749 = vunpack.c.l.b16 %v354
    %v750 = vunpack.c.l.b16 %v355
    %v751 = vunpack.c.l.b16 %v356
    %v752 = vunpack.c.l.b16 %v357
    %v753 = vunpack.c.l.b16 %v358
    %v754 = vunpack.c.l.b16 %v359
    %v755 = vunpack.c.l.b16 %v360
    %v756 = vunpack.c.l.b16 %v361
    %v757 = vunpack.c.l.b16 %v362
    %v758 = vunpack.c.l.b16 %v363
    %v759 = vunpack.c.l.b16 %v364
    %v760 = vunpack.c.l.b16 %v365
    %v761 = vunpack.c.l.b16 %v366
    %v762 = vunpack.c.l.b16 %v367
    %v763 = vunpack.c.l.b16 %v368
    %v764 = vunpack.c.l.b16 %v369
    %v765 = vunpack.c.l.b16 %v370
    %v766 = vunpack.c.l.b16 %v371
    %v767 = vunpack.c.l.b16 %v372
    %v768 = vunpack.c.l.b16 %v373
    %v769 = vunpack.c.l.b16 %v374
    %v770 = vunpack.c.l.b16 %v375
    %v771 = vunpack.c.l.b16 %v376
    %v772 = vunpack.c.l.b16 %v377
    %v773 = vunpack.c.l.b16 %v378
    %v774 = vunpack.c.l.b16 %v379
    %v775 = vunpack.c.l.b16 %v380
    %v776 = vunpack.c.l.b16 %v381
    %v777 = vunpack.c.l.b16 %v382
    %v778 = vunpack.c.l.b16 %v383
    %v779 = vunpack.c.l.b16 %v384
    %v780 = vunpack.c.l.b16 %v385
    %v781 = vunpack.c.l.b16 %v386
    %v782 = vunpack.c.l.b16 %v387
    %v783 = vunpack.c.l.b16 %v388
    %v784 = vunpack.c.l.b16 %v389
    %v785 = vunpack.c.l.b16 %v390
    %v786 = vunpack.c.l.b16 %v391
    %v787 = vunpack.c.l.b16 %v392
    %v788 = vunpack.c.l.b16 %v393
    %v789 = vunpack.c.l.b16 %v394
    %v790 = vunpack.c.l.b16 %v395
    %v791 = vunpack.c.l.b16 %v396
    %v792 = vunpack.c.l.b16 %v397
    %v793 = vunpack.c.l.b16 %v398
    %v794 = vunpack.c.l.b16 %v399
    %v795 = vunpack.c.l.b16 %v400
    %v796 = vunpack.c.l.b16 %v401
    %v797 = vunpack.c.l.b16 %v402
    %v798 = vunpack.c.l.b16 %v403
    %v799 = vunpack.c.l.b16 %v404
    %v800 = vunpack.c.l.b16 %v405
    %v801 = vunpack.c.l.b16 %v406
    %v802 = vunpack.c.l.b16 %v407
    %v803 = vunpack.c.l.b16 %v408
    %v804 = vunpack.c.l.b16 %v409
    %v805 = vunpack.c.l.b16 %v410
    %v806 = vunpack.c.l.b16 %v411
    %v807 = vunpack.c.l.b16 %v412
    %v808 = vunpack.c.l.b16 %v413
    %v809 = vunpack.c.l.b16 %v414
    %v810 = vunpack.c.l.b16 %v415
    %v811 = vunpack.c.l.b16 %v416
    %v812 = vunpack.c.l.b16 %v417
    %v813 = vunpack.c.l.b16 %v418
    %v814 = vunpack.c.l.b16 %v419
    %v815 = vunpack.c.l.b16 %v420
    %v816 = vunpack.c.l.b16 %v421
    %v817 = vunpack.c.l.b16 %v422
    %v818 = vunpack.c.l.b16 %v423
    %v819 = vunpack.c.l.b16 %v424
    %v820 = vunpack.c.l.b16 %v425
    %v821 = vunpack.c.l.b16 %v426
    %v822 = vunpack.c.l.b16 %v427
    %v823 = vunpack.c.l.b16 %v428
    %v824 = vunpack.c.l.b16 %v429
    %v825 = vunpack.c.l.b16 %v430
    %v826 = vunpack.c.l.b16 %v431
    %v827 = vunpack.c.l.b16 %v432
    %v828 = vunpack.c.l.b16 %v433
    %v829 = vunpack.c.l.b16 %v434
    %v830 = vunpack.c.l.b16 %v435
    %v831 = vunpack.c.l.b16 %v436
    %v832 = vunpack.c.l.b16 %v437
    %v833 = vunpack.c.l.b16 %v438
    %v834 = vunpack.c.l.b16 %v439
    %v835 = vunpack.c.l.b16 %v440
    %v836 = vunpack.c.l.b16 %v441
    %v837 = vunpack.c.l.b16 %v442
    %v838 = vunpack.c.l.b16 %v443
    %v839 = vunpack.c.l.b16 %v444
    %v840 = vunpack.c.l.b16 %v445
    %v841 = vunpack.c.l.b16 %v446
    %v842 = vpack.c.b16 %v683, %v682
    %v843 = vpack.c.b16 %v685, %v684
    %v844 = vpack.c.b16 %v687, %v686
    %v845 = vpack.c.b16 %v689, %v688
    %v846 = vpack.c.b16 %v691, %v690
    %v847 = vpack.c.b16 %v693, %v692
    %v848 = vpack.c.b16 %v695, %v694
    %v849 = vpack.c.b16 %v697, %v696
    %v850 = vpack.c.b16 %v699, %v698
    %v851 = vpack.c.b16 %v701, %v700
    %v852 = vpack.c.b16 %v703, %v702
    %v853 = vpack.c.b16 %v705, %v704
    %v854 = vpack.c.b16 %v707, %v706
    %v855 = vpack.c.b16 %v709, %v708
    %v856 = vpack.c.b16 %v711, %v710
    %v857 = vpack.c.b16 %v713, %v712
    %v858 = vpack.c.b16 %v715, %v714
    %v859 = vpack.c.b16 %v717, %v716
    %v860 = vpack.c.b16 %v719, %v718
    %v861 = vpack.c.b16 %v721, %v720
    %v862 = vpack.c.b16 %v723, %v722
    %v863 = vpack.c.b16 %v725, %v724
    %v864 = vpack.c.b16 %v727, %v726
    %v865 = vpack.c.b16 %v729, %v728
    %v866 = vpack.c.b16 %v731, %v730
    %v867 = vpack.c.b16 %v733, %v732
    %v868 = vpack.c.b16 %v735, %v734
    %v869 = vpack.c.b16 %v737, %v736
    %v870 = vpack.c.b16 %v739, %v738
    %v871 = vpack.c.b16 %v741, %v740
    %v872 = vpack.c.b16 %v743, %v742
    %v873 = vpack.c.b16 %v745, %v744
    %v874 = vpack.c.b16 %v747, %v746
    %v875 = vpack.c.b16 %v749, %v748
    %v876 = vpack.c.b16 %v751, %v750
    %v877 = vpack.c.b16 %v753, %v752
    %v878 = vpack.c.b16 %v755, %v754
    %v879 = vpack.c.b16 %v757, %v756
    %v880 = vpack.c.b16 %v759, %v758
    %v881 = vpack.c.b16 %v761, %v760
    %v882 = vpack.c.b16 %v763, %v762
    %v883 = vpack.c.b16 %v765, %v764
    %v884 = vpack.c.b16 %v767, %v766
    %v885 = vpack.c.b16 %v769, %v768
    %v886 = vpack.c.b16 %v771, %v770
    %v887 = vpack.c.b16 %v773, %v772
    %v888 = vpack.c.b16 %v775, %v774
    %v889 = vpack.c.b16 %v777, %v776
    %v890 = vpack.c.b16 %v779, %v778
    %v891 = vpack.c.b16 %v781, %v780
    %v892 = vpack.c.b16 %v783, %v782
    %v893 = vpack.c.b16 %v785, %v784
    %v894 = vpack.c.b16 %v787, %v786
    %v895 = vpack.c.b16 %v789, %v788
    %v896 = vpack.c.b16 %v791, %v790
    %v897 = vpack.c.b16 %v793, %v792
    %v898 = vpack.c.b16 %v795, %v794
    %v899 = vpack.c.b16 %v797, %v796
    %v900 = vpack.c.b16 %v799, %v798
    %v901 = vpack.c.b16 %v801, %v800
    %v902 = vpack.c.b16 %v803, %v802
    %v903 = vpack.c.b16 %v805, %v804
    %v904 = vpack.c.b16 %v807, %v806
    %v905 = vpack.c.b16 %v809, %v808
    %v906 = vpack.c.b16 %v811, %v810
    %v907 = vpack.c.b16 %v813, %v812
    %v908 = vpack.c.b16 %v815, %v814
    %v909 = vpack.c.b16 %v817, %v816
    %v910 = vpack.c.b16 %v819, %v818
    %v911 = vpack.c.b16 %v821, %v820
    %v912 = vpack.c.b16 %v823, %v822
    %v913 = vpack.c.b16 %v825, %v824
    %v914 = vpack.c.b16 %v827, %v826
    %v915 = vpack.c.b16 %v829, %v828
    %v916 = vpack.c.b16 %v831, %v830
    %v917 = vpack.c.b16 %v833, %v832
    %v918 = vpack.c.b16 %v835, %v834
    %v919 = vpack.c.b16 %v837, %v836
    %v920 = vpack.c.b16 %v839, %v838
    %v921 = vpack.c.b16 %v841, %v840
    %1002 = vmatpush.bf16.msra.mxu0 %v849
    %1003 = vmatpush.bf16.msra.mxu0 %v848
    %1004 = vmatpush.bf16.msra.mxu0 %v847
    %1005 = vmatpush.bf16.msra.mxu0 %v846
    %1006 = vmatpush.bf16.msra.mxu0 %v845
    %1007 = vmatpush.bf16.msra.mxu0 %v844
    %1008 = vmatpush.bf16.msra.mxu0 %v843
    %1009 = vmatpush.bf16.msra.mxu0 %v842
    %1010 = vmatmul.bf16.gmra.mxu0 %v502
    %v1011 = vpop.f32.mrf.mxu0
    %v1012 = vadd.f32 %v449, %v1011
    %v1013 = vpop.f32.mrf.mxu0
    %1014 = vdwg.mxu0
    %1015 = vmatpush.bf16.msra.mxu0 %v857
    %1016 = vmatpush.bf16.msra.mxu0 %v856
    %1017 = vmatpush.bf16.msra.mxu0 %v855
    %1018 = vmatpush.bf16.msra.mxu0 %v854
    %1019 = vmatpush.bf16.msra.mxu0 %v853
    %1020 = vmatpush.bf16.msra.mxu0 %v852
    %1021 = vmatpush.bf16.msra.mxu0 %v851
    %1022 = vmatpush.bf16.msra.mxu0 %v850
    %1023 = vmatmul.bf16.gmra.mxu0 %v503
    %v1024 = vpop.f32.mrf.mxu0
    %v1025 = vadd.f32 %v1012, %v1024
    %v1026 = vpop.f32.mrf.mxu0
    %1027 = vdwg.mxu0
    %1028 = vmatpush.bf16.msra.mxu0 %v865
    %1029 = vmatpush.bf16.msra.mxu0 %v864
    %1030 = vmatpush.bf16.msra.mxu0 %v863
    %1031 = vmatpush.bf16.msra.mxu0 %v862
    %1032 = vmatpush.bf16.msra.mxu0 %v861
    %1033 = vmatpush.bf16.msra.mxu0 %v860
    %1034 = vmatpush.bf16.msra.mxu0 %v859
    %1035 = vmatpush.bf16.msra.mxu0 %v858
    %1036 = vmatmul.bf16.gmra.mxu0 %v504
    %v1037 = vpop.f32.mrf.mxu0
    %v1038 = vadd.f32 %v1025, %v1037
    %v1039 = vpop.f32.mrf.mxu0
    %1040 = vdwg.mxu0
    %1041 = vmatpush.bf16.msra.mxu0 %v873
    %1042 = vmatpush.bf16.msra.mxu0 %v872
    %1043 = vmatpush.bf16.msra.mxu0 %v871
    %1044 = vmatpush.bf16.msra.mxu0 %v870
    %1045 = vmatpush.bf16.msra.mxu0 %v869
    %1046 = vmatpush.bf16.msra.mxu0 %v868
    %1047 = vmatpush.bf16.msra.mxu0 %v867
    %1048 = vmatpush.bf16.msra.mxu0 %v866
    %1049 = vmatmul.bf16.gmra.mxu0 %v505
    %v1050 = vpop.f32.mrf.mxu0
    %v1051 = vadd.f32 %v1038, %v1050
    %v1052 = vpop.f32.mrf.mxu0
    %1053 = vdwg.mxu0
    %1054 = vmatpush.bf16.msra.mxu0 %v881
    %1055 = vmatpush.bf16.msra.mxu0 %v880
    %1056 = vmatpush.bf16.msra.mxu0 %v879
    %1057 = vmatpush.bf16.msra.mxu0 %v878
    %1058 = vmatpush.bf16.msra.mxu0 %v877
    %1059 = vmatpush.bf16.msra.mxu0 %v876
    %1060 = vmatpush.bf16.msra.mxu0 %v875
    %1061 = vmatpush.bf16.msra.mxu0 %v874
    %1062 = vmatmul.bf16.gmra.mxu0 %v506
    %v1063 = vpop.f32.mrf.mxu0
    %v1064 = vadd.f32 %v1051, %v1063
    %v1065 = vpop.f32.mrf.mxu0
    %1066 = vdwg.mxu0
    %1067 = vmatpush.bf16.msra.mxu0 %v889
    %1068 = vmatpush.bf16.msra.mxu0 %v888
    %1069 = vmatpush.bf16.msra.mxu0 %v887
    %1070 = vmatpush.bf16.msra.mxu0 %v886
    %1071 = vmatpush.bf16.msra.mxu0 %v885
    %1072 = vmatpush.bf16.msra.mxu0 %v884
    %1073 = vmatpush.bf16.msra.mxu0 %v883
    %1074 = vmatpush.bf16.msra.mxu0 %v882
    %1075 = vmatmul.bf16.gmra.mxu0 %v507
    %v1076 = vpop.f32.mrf.mxu0
    %v1077 = vadd.f32 %v1064, %v1076
    %v1078 = vpop.f32.mrf.mxu0
    %1079 = vdwg.mxu0
    %1080 = vmatpush.bf16.msra.mxu0 %v897
    %1081 = vmatpush.bf16.msra.mxu0 %v896
    %1082 = vmatpush.bf16.msra.mxu0 %v895
    %1083 = vmatpush.bf16.msra.mxu0 %v894
    %1084 = vmatpush.bf16.msra.mxu0 %v893
    %1085 = vmatpush.bf16.msra.mxu0 %v892
    %1086 = vmatpush.bf16.msra.mxu0 %v891
    %1087 = vmatpush.bf16.msra.mxu0 %v890
    %1088 = vmatmul.bf16.gmra.mxu0 %v508
    %v1089 = vpop.f32.mrf.mxu0
    %v1090 = vadd.f32 %v1077, %v1089
    %v1091 = vpop.f32.mrf.mxu0
    %1092 = vdwg.mxu0
    %1093 = vmatpush.bf16.msra.mxu0 %v905
    %1094 = vmatpush.bf16.msra.mxu0 %v904
    %1095 = vmatpush.bf16.msra.mxu0 %v903
    %1096 = vmatpush.bf16.msra.mxu0 %v902
    %1097 = vmatpush.bf16.msra.mxu0 %v901
    %1098 = vmatpush.bf16.msra.mxu0 %v900
    %1099 = vmatpush.bf16.msra.mxu0 %v899
    %1100 = vmatpush.bf16.msra.mxu0 %v898
    %1101 = vmatmul.bf16.gmra.mxu0 %v509
    %v1102 = vpop.f32.mrf.mxu0
    %v1103 = vadd.f32 %v1090, %v1102
    %v1104 = vpop.f32.mrf.mxu0
    %1105 = vdwg.mxu0
    %1106 = vmatpush.bf16.msra.mxu0 %v913
    %1107 = vmatpush.bf16.msra.mxu0 %v912
    %1108 = vmatpush.bf16.msra.mxu0 %v911
    %1109 = vmatpush.bf16.msra.mxu0 %v910
    %1110 = vmatpush.bf16.msra.mxu0 %v909
    %1111 = vmatpush.bf16.msra.mxu0 %v908
    %1112 = vmatpush.bf16.msra.mxu0 %v907
    %1113 = vmatpush.bf16.msra.mxu0 %v906
    %1114 = vmatmul.bf16.gmra.mxu0 %v510
    %v1115 = vpop.f32.mrf.mxu0
    %v1116 = vadd.f32 %v1103, %v1115
    %v1117 = vpop.f32.mrf.mxu0
    %1118 = vdwg.mxu0
    %1119 = vmatpush.bf16.msra.mxu0 %v921
    %1120 = vmatpush.bf16.msra.mxu0 %v920
    %1121 = vmatpush.bf16.msra.mxu0 %v919
    %1122 = vmatpush.bf16.msra.mxu0 %v918
    %1123 = vmatpush.bf16.msra.mxu0 %v917
    %1124 = vmatpush.bf16.msra.mxu0 %v916
    %1125 = vmatpush.bf16.msra.mxu0 %v915
    %1126 = vmatpush.bf16.msra.mxu0 %v914
    %1127 = vmatmul.bf16.gmra.mxu0 %v511
    %v1128 = vpop.f32.mrf.mxu0
    %v1129 = vadd.f32 %v1116, %v1128
    %v1130 = vpop.f32.mrf.mxu0
    %1131 = vdwg.mxu0
    %1132 = vst [vmem:[#allocation7] sm:$0x3] %v1129
    // Predicated region
    $region22: #{tpu_custom_call.1} parent=1 // pred_check
      _
    $region23: #{tpu_custom_call.1} parent=1 // pred_check_branch
      %1134 = sbr.rel (0) target = $region25
    $region24: #{tpu_custom_call.1} parent=1 // pred_region
      %1136 = vsyncadd [#allocation4], 0
      %s1138 = sshll.u32 [#allocation7], 4
      %s1139 = int_to_ptr.vmem [resolvable:$true] %s1138
      %s1140 = sshll.u32 %s3, 4
      %s1141 = int_to_ptr.hbm [resolvable:$true] %s1140
      %1143 = dma.vmem_to_hbm [thread:$0]  %s1139, 32, %s1141, [#allocation4]
    $region25: #{tpu_custom_call.1} parent=1 // pred_fallthru
      _
    // Predicated region
    $region26: #{tpu_custom_call.1} parent=1 // pred_check
      _
    $region27: #{tpu_custom_call.1} parent=1 // pred_check_branch
      %1145 = sbr.rel (0) target = $region29
    $region28: #{tpu_custom_call.1} parent=1 // pred_region
      %1147 = dma.done [#allocation4], 32
    $region29: #{tpu_custom_call.1} parent=1 // pred_fallthru
      _
    %1148 = vsyncpa [#allocation3], 1
    %1149 = vsyncpa [#allocation6], 1
    %1150 = vsyncpa [#allocation4], 1

</llo_original>
